<compile_context>
chip_gen: v5e
topology: v5e:2x2
jax: 0.10.0
libtpu: 0.0.40
codegen_flags: <defaults>
</compile_context>

<pallas_src>
import functools

import jax
import jax.numpy as jnp
import numpy as np
from jax.experimental import pallas as pl
from jax.experimental.pallas import tpu as pltpu

_SUB = 8
_LANE = 128
_TILE_QUANTUM = _SUB * _LANE  # 1024 elements


# ---------------------------------------------------------------------------
# Kernels
# ---------------------------------------------------------------------------
def _power_kernel(x_ref, xsq_ref, *, tile, n_inner, valid_len, needs_mask):
    """Accumulates a per-core partial sum(x^2) over T-tiles.

    Grid = (ncs, n_inner): leading axis is the (v7x) core-parallel split, the
    inner axis streams T-tiles.  OOB / ragged tiles are masked to zero.
    """
    c = pl.program_id(0)
    i = pl.program_id(1)

    @pl.when(i == 0)
    def _():
        xsq_ref[...] = jnp.zeros_like(xsq_ref)

    x = x_ref[...].astype(jnp.float32)          # (C, tile)
    if needs_mask:
        start = (c * n_inner + i) * tile        # global column of this tile
        col = start + jax.lax.broadcasted_iota(jnp.int32, x.shape, 1)
        x = jnp.where(col < valid_len, x, 0.0)  # ragged tail + OOB core tiles
    xsq_ref[...] += jnp.sum(x * x)


def _apply_kernel(xsq_ref, alpha_ref, x_ref, n_ref, o_ref):
    """o = x + (alpha * sqrt(sum_x2)) * noise.

    xsq_ref : (ncs, 1, 1) phase-1 partials, resident in VMEM.
    alpha   : SMEM scalar = inv_snr / sqrt(sum(noise^2)).
    The trailing ragged tile reads unspecified data past T; those columns are
    never stored (Pallas clips the output writeback to the array bounds).
    """
    xsq = jnp.sum(xsq_ref[...], axis=0)                 # (1, 1) f32
    scale = alpha_ref[0, 0] * jnp.sqrt(xsq)             # (1, 1), vector sqrt
    x = x_ref[...].astype(jnp.float32)                  # (C, tile)
    n = n_ref[...].astype(jnp.float32)                  # (1, tile)
    o_ref[...] = (x + scale * n).astype(o_ref.dtype)


# ---------------------------------------------------------------------------
# Tiling / VMEM planning
# ---------------------------------------------------------------------------
def _vmem_plan():
    """Returns (double-buffered working-set budget, scoped VMEM limit)."""
    cap = 64 << 20
    try:
        cap = int(getattr(pltpu.get_tpu_info(), "vmem_capacity_bytes", cap))
    except Exception:
        pass
    if cap <= (64 << 20):            # v7x-class: 64 MiB physical per TensorCore
        return 24 << 20, 32 << 20
    return 48 << 20, 64 << 20        # v5e / v6e: 128 MiB physical


def _pick_tile(T, phys_bytes_per_col, workset_budget, max_tile_elems=None):
    """Largest T-tile (multiple of 8*128) whose 2-deep buffering fits budget.

    phys_bytes_per_col accounts for sublane padding: a (C, tile) f32 block
    occupies ceil(C/8)*8 * tile * 4 bytes of VMEM.
    """
    cap = workset_budget // (2 * phys_bytes_per_col)
    if max_tile_elems is not None:
        cap = min(cap, max_tile_elems)
    cap = max(_TILE_QUANTUM, (cap // _TILE_QUANTUM) * _TILE_QUANTUM)
    need = -(-T // _TILE_QUANTUM) * _TILE_QUANTUM
    return max(_TILE_QUANTUM, min(cap, need))


# ---------------------------------------------------------------------------
# Wrapper: two-phase reduce -> apply, no padding copies
# ---------------------------------------------------------------------------
def apply_babble_noise(x, noise_slice, n_sumsq, inv_snr, *, max_tile_elems=None):
    """x: (C, T), noise_slice: (1, T), n_sumsq = sum(noise^2), inv_snr scalar."""
    C, T = x.shape
    c_pad = -(-C // _SUB) * _SUB                      # sublane-padded rows
    workset, vmem_limit = _vmem_plan()

    # ---- Phase 1: sum(x^2), streamed over T-tiles, 2-way core split --------
    tile1 = _pick_tile(T, c_pad * 4, workset, max_tile_elems)
    nT1 = -(-T // tile1)
    ncs = 2 if nT1 > 1 else 1                         # v7x megacore split
    n_inner = -(-nT1 // ncs)
    needs_mask = (T % tile1 != 0) or (ncs * n_inner != nT1)

    xsq_partials = pl.pallas_call(
        functools.partial(_power_kernel, tile=tile1, n_inner=n_inner,
                          valid_len=T, needs_mask=needs_mask),
        out_shape=jax.ShapeDtypeStruct((ncs, 1, 1), jnp.float32),
        grid_spec=pl.GridSpec(
            grid=(ncs, n_inner),
            in_specs=[pl.BlockSpec(
                (C, tile1),
                lambda c, i: (0, jnp.minimum(c * n_inner + i, nT1 - 1)))],
            out_specs=pl.BlockSpec((1, 1, 1), lambda c, i: (c, 0, 0)),
        ),
        compiler_params=pltpu.CompilerParams(
            dimension_semantics=("parallel", "arbitrary"),
            vmem_limit_bytes=vmem_limit),
    )(x)

    # alpha is independent of the phase-1 output (noise power comes from the
    # prefix sums), so this tiny fusion is off the phase1->phase2 critical
    # path.  eps only guards an all-zero noise window.
    alpha = (jnp.asarray(inv_snr, jnp.float32) *
             jax.lax.rsqrt(jnp.maximum(jnp.asarray(n_sumsq, jnp.float32),
                                       1e-30))).reshape(1, 1)

    # ---- Phase 2: out = x + scale * noise (pipelined, parallel) ------------
    tile2 = _pick_tile(T, (2 * c_pad + _SUB) * 4, workset, max_tile_elems)
    nT2 = -(-T // tile2)

    return pl.pallas_call(
        _apply_kernel,
        out_shape=jax.ShapeDtypeStruct((C, T), x.dtype),
        grid_spec=pl.GridSpec(
            grid=(nT2,),
            in_specs=[
                # (ncs,1,1) partials: single full block, constant index -> resident.
                pl.BlockSpec((ncs, 1, 1), lambda i: (0, 0, 0)),
                pl.BlockSpec(memory_space=pltpu.MemorySpace.SMEM),   # alpha
                pl.BlockSpec((C, tile2), lambda i: (0, i)),
                pl.BlockSpec((1, tile2), lambda i: (0, i)),
            ],
            out_specs=pl.BlockSpec((C, tile2), lambda i: (0, i)),
        ),
        compiler_params=pltpu.CompilerParams(
            dimension_semantics=("parallel",),
            vmem_limit_bytes=vmem_limit),
    )(xsq_partials, alpha, x, noise_slice)


# ---------------------------------------------------------------------------
# Jitted module forward (on-device SNR/offset draws; identity short-circuit)
# ---------------------------------------------------------------------------
@jax.jit
def babble_noise_forward(x, noise, cs_hi, cs_lo, snr_vals, snr_valid, rng):
    T = x.shape[-1]
    k1, k2 = jax.random.split(rng)
    idx = jax.random.randint(k1, (), 0, snr_vals.shape[0])
    snr_db = snr_vals[idx]
    valid = snr_valid[idx]
    max_pos = noise.shape[-1] - T + 1          # caller guarantees noise_len >= T
    pos = jax.random.randint(k2, (), 0, max_pos)

    def _apply(x_):
        noise_slice = jax.lax.dynamic_slice_in_dim(noise, pos, T, axis=1)
        # sum(noise^2) over the window from the precomputed hi/lo prefix sums.
        n_sumsq = ((cs_hi[pos + T] - cs_hi[pos]) +
                   (cs_lo[pos + T] - cs_lo[pos]))
        inv_snr = jnp.power(10.0, -snr_db / 20.0)   # 1/sqrt(10^(SNR_db/10))
        return apply_babble_noise(x_, noise_slice, n_sumsq, inv_snr)

    # SNR_db = None -> skip all kernel work entirely.
    return jax.lax.cond(valid, _apply, lambda x_: x_, x)


class BabbleNoise:
    """JAX/Pallas port of the PyTorch BabbleNoise module."""

    def __init__(self, noise_len=16384,
                 SNR_db=(-5, 0, 5, 10, 15, 20, None), seed=1234):
        key = jax.random.PRNGKey(seed)
        # TODO(synk): torchaudio.load + resample of the babble recording have
        # no Pallas/JAX equivalent; a deterministic synthetic noise buffer
        # stands in for it.
        base = 0.1 * np.asarray(
            jax.random.normal(key, (1, noise_len), dtype=jnp.float32))
        self._base_noise = base.astype(np.float32)
        self._set_noise_buffers(self._base_noise)

        vals, valid = [], []
        for s in SNR_db:
            vals.append(0.0 if s is None else float(s))
            valid.append(s is not None)
        self.snr_vals = jnp.asarray(vals, jnp.float32)
        self.snr_valid = jnp.asarray(valid, jnp.bool_)

    def _set_noise_buffers(self, noise_np):
        # noise^2 prefix sums in float64 on host, stored as f32 hi/lo pair so
        # the windowed difference stays accurate for long buffers.
        cs = np.concatenate([np.zeros(1, np.float64),
                             np.cumsum(noise_np[0].astype(np.float64) ** 2)])
        hi = cs.astype(np.float32)
        lo = (cs - hi.astype(np.float64)).astype(np.float32)
        self.noise = jnp.asarray(noise_np, jnp.float32)
        self.cs_hi = jnp.asarray(hi)
        self.cs_lo = jnp.asarray(lo)

    def _ensure_capacity(self, T):
        # Guard against T > noise_len (original module assumes it never is).
        if T <= self.noise.shape[-1]:
            return
        reps = -(-T // self._base_noise.shape[-1])
        self._set_noise_buffers(np.tile(self._base_noise, (1, reps)))

    def __call__(self, x, rng):
        """x: (C, T) float32, rng: jax PRNGKey -> (C, T)."""
        self._ensure_capacity(x.shape[-1])
        return babble_noise_forward(x, self.noise, self.cs_hi, self.cs_lo,
                                    self.snr_vals, self.snr_valid, rng)


# ---------------------------------------------------------------------------
# Pure-JAX reference + tests
# ---------------------------------------------------------------------------
def _reference(x, noise_slice, snr_db):
    snr = (10.0 ** (snr_db / 10.0)) ** 0.5
    T = x.shape[-1]
    x_power = jnp.sum(x ** 2) / T
    n_power = jnp.sum(noise_slice ** 2) / T
    return x + (1.0 / snr) * noise_slice * jnp.sqrt(x_power / n_power)


if __name__ == "__main__":
    key = jax.random.PRNGKey(0)
    kx, kfwd = jax.random.split(key)

    C, T = 2, 4000  # small shapes; T not a tile multiple -> ragged-tail path
    x = jax.random.normal(kx, (C, T), dtype=jnp.float32)

    module = BabbleNoise(noise_len=16384)

    # 1) Full jitted forward; replicate the on-device draws for a value check.
    y = jax.block_until_ready(module(x, kfwd))
    assert y.shape == x.shape and y.dtype == x.dtype
    k1, k2 = jax.random.split(kfwd)
    idx = int(jax.random.randint(k1, (), 0, module.snr_vals.shape[0]))
    pos = int(jax.random.randint(k2, (), 0, module.noise.shape[-1] - T + 1))
    if bool(module.snr_valid[idx]):
        ref_fwd = _reference(
            x, jax.lax.dynamic_slice_in_dim(module.noise, pos, T, axis=1),
            float(module.snr_vals[idx]))
    else:
        ref_fwd = x
    assert jnp.allclose(y, ref_fwd, atol=1e-3, rtol=1e-3), "forward mismatch"

    # 2) Direct kernel path vs reference.  max_tile_elems=1024 forces a
    #    multi-tile grid (exercising the 2-way phase-1 split, the masked
    #    ragged tail and the clipped trailing output block); None uses the
    #    default generation-aware tiles.
    pos = 3
    noise_slice = jax.lax.dynamic_slice_in_dim(module.noise, pos, T, axis=1)
    n_sumsq = ((module.cs_hi[pos + T] - module.cs_hi[pos]) +
               (module.cs_lo[pos + T] - module.cs_lo[pos]))
    assert jnp.allclose(n_sumsq, jnp.sum(noise_slice ** 2), rtol=1e-5), \
        "prefix-sum noise power mismatch"
    for snr_db in (10.0, -5.0):
        inv_snr = jnp.float32(10.0 ** (-snr_db / 20.0))
        ref = _reference(x, noise_slice, snr_db)
        for max_tile in (1024, None):
            out = jax.block_until_ready(apply_babble_noise(
                x, noise_slice, n_sumsq, inv_snr, max_tile_elems=max_tile))
            assert out.shape == x.shape and out.dtype == x.dtype
            assert jnp.allclose(out, ref, atol=1e-3, rtol=1e-3), \
                f"mismatch vs reference (SNR_db={snr_db}, max_tile={max_tile})"

    # 3) SNR_db=None branch short-circuits to an exact identity.
    y_id = jax.block_until_ready(babble_noise_forward(
        x, module.noise, module.cs_hi, module.cs_lo,
        module.snr_vals, jnp.zeros_like(module.snr_valid), kfwd))
    assert jnp.allclose(y_id, x), "identity branch mismatch"

    print("KERNEL_OK")
</pallas_src>

<mosaic_0001>
module attributes {stable_mosaic.version = 11 : i64} {
  func.func @_power_kernel(%arg0: i32, %arg1: i32, %arg2: memref<2x4096xf32, #tpu.memory_space<vmem>>, %arg3: memref<1x1x1xf32, #tpu.memory_space<vmem>>) attributes {dimension_semantics = [#tpu.dimension_semantics<parallel>, #tpu.dimension_semantics<arbitrary>], iteration_bounds = array<i64: 1, 1>, scalar_prefetch = 0 : i64, scratch_operands = 0 : i64, tpu.core_type = #tpu.core_type<tc>, window_params = [{transform_indices = @transform_0, window_bounds = array<i64: 2, 4096>}, {transform_indices = @transform_1, window_bounds = array<i64: 1, 1, 1>}]} {
    %c0_i32 = arith.constant 0 : i32
    %0 = arith.cmpi eq, %arg1, %c0_i32 : i32
    %1 = arith.extui %0 : i1 to i32
    %c0_i32_0 = arith.constant 0 : i32
    %2 = arith.cmpi ne, %1, %c0_i32_0 : i32
    scf.if %2 {
      %cst_9 = arith.constant 0.000000e+00 : f32
      %23 = vector.broadcast %cst_9 : f32 to vector<1x1x1xf32>
      %c0_10 = arith.constant 0 : index
      %c0_11 = arith.constant 0 : index
      %c0_12 = arith.constant 0 : index
      %24 = vector.load %arg3[%c0_10, %c0_11, %c0_12] : memref<1x1x1xf32, #tpu.memory_space<vmem>>, vector<1x1x1xf32>
      tpu.vector_store %arg3[%c0_10, %c0_11, %c0_12], %23 {strides = array<i32>} : memref<1x1x1xf32, #tpu.memory_space<vmem>>, vector<1x1x1xf32>,
    } else {
    }
    %c0 = arith.constant 0 : index
    %c0_1 = arith.constant 0 : index
    %3 = vector.load %arg2[%c0, %c0_1] : memref<2x4096xf32, #tpu.memory_space<vmem>>, vector<2x4096xf32>
    %c1_i32 = arith.constant 1 : i32
    %4 = arith.muli %arg0, %c1_i32 : i32
    %5 = arith.addi %4, %arg1 : i32
    %c4096_i32 = arith.constant 4096 : i32
    %6 = arith.muli %5, %c4096_i32 : i32
    %7 = tpu.iota {dimensions = array<i32: 1>} : vector<2x4096xi32>
    %8 = vector.broadcast %6 : i32 to vector<2x4096xi32>
    %9 = arith.addi %8, %7 : vector<2x4096xi32>
    %c4000_i32 = arith.constant 4000 : i32
    %10 = vector.broadcast %c4000_i32 : i32 to vector<2x4096xi32>
    %11 = arith.cmpi slt, %9, %10 : vector<2x4096xi32>
    %cst = arith.constant 0.000000e+00 : f32
    %12 = vector.broadcast %cst : f32 to vector<2x4096xf32>
    %13 = arith.select %11, %3, %12 : vector<2x4096xi1>, vector<2x4096xf32>
    %c0_2 = arith.constant 0 : index
    %c0_3 = arith.constant 0 : index
    %c0_4 = arith.constant 0 : index
    %14 = vector.load %arg3[%c0_2, %c0_3, %c0_4] : memref<1x1x1xf32, #tpu.memory_space<vmem>>, vector<1x1x1xf32>
    %15 = arith.mulf %13, %13 : vector<2x4096xf32>
    %16 = vector.shape_cast %15 : vector<2x4096xf32> to vector<1x2x4096xf32>
    %cst_5 = arith.constant dense<0.000000e+00> : vector<1xf32>
    %17 = vector.multi_reduction <add>, %16, %cst_5 [1, 2] : vector<1x2x4096xf32> to vector<1xf32>
    %18 = vector.shape_cast %17 : vector<1xf32> to vector<1x1x1xf32>
    %19 = vector.extract %18[0, 0, 0] : f32 from vector<1x1x1xf32>
    %20 = vector.broadcast %19 : f32 to vector<1x1x1xf32>
    %21 = arith.addf %14, %20 : vector<1x1x1xf32>
    %c0_6 = arith.constant 0 : index
    %c0_7 = arith.constant 0 : index
    %c0_8 = arith.constant 0 : index
    %22 = vector.load %arg3[%c0_6, %c0_7, %c0_8] : memref<1x1x1xf32, #tpu.memory_space<vmem>>, vector<1x1x1xf32>
    tpu.vector_store %arg3[%c0_6, %c0_7, %c0_8], %21 {strides = array<i32>} : memref<1x1x1xf32, #tpu.memory_space<vmem>>, vector<1x1x1xf32>,
    return
  }
  func.func @transform_0(%arg0: i32, %arg1: i32) -> (i32, i32) {
    %c1_i32 = arith.constant 1 : i32
    %0 = arith.muli %arg0, %c1_i32 : i32
    %1 = arith.addi %0, %arg1 : i32
    %c0_i32 = arith.constant 0 : i32
    %2 = arith.minsi %1, %c0_i32 : i32
    %c0_i32_0 = arith.constant 0 : i32
    %c0_i32_1 = arith.constant 0 : i32
    return %c0_i32_0, %2 : i32, i32
  }
  func.func @transform_1(%arg0: i32, %arg1: i32) -> (i32, i32, i32) {
    %c0_i32 = arith.constant 0 : i32
    %c0_i32_0 = arith.constant 0 : i32
    %c0_i32_1 = arith.constant 0 : i32
    return %arg0, %c0_i32, %c0_i32_0 : i32, i32, i32
  }
}

module attributes {stable_mosaic.version = 11 : i64} {
  func.func @_apply_kernel(%arg0: i32, %arg1: memref<1x1x1xf32, #tpu.memory_space<vmem>>, %arg2: memref<1x1xf32, #tpu.memory_space<smem>>, %arg3: memref<2x4096xf32, #tpu.memory_space<vmem>>, %arg4: memref<1x4096xf32, #tpu.memory_space<vmem>>, %arg5: memref<2x4096xf32, #tpu.memory_space<vmem>>) attributes {dimension_semantics = [#tpu.dimension_semantics<parallel>], iteration_bounds = array<i64: 1>, scalar_prefetch = 0 : i64, scratch_operands = 0 : i64, tpu.core_type = #tpu.core_type<tc>, window_params = [{pipeline_mode = #tpu.pipeline_mode<synchronous>, transform_indices = @transform_0, window_bounds = array<i64: 1, 1, 1>}, {transform_indices = @transform_1, window_bounds = array<i64: 1, 1>}, {transform_indices = @transform_2, window_bounds = array<i64: 2, 4096>}, {transform_indices = @transform_3, window_bounds = array<i64: 1, 4096>}, {transform_indices = @transform_4, window_bounds = array<i64: 2, 4096>}]} {
    %c0 = arith.constant 0 : index
    %c0_0 = arith.constant 0 : index
    %c0_1 = arith.constant 0 : index
    %0 = vector.load %arg1[%c0, %c0_0, %c0_1] : memref<1x1x1xf32, #tpu.memory_space<vmem>>, vector<1x1x1xf32>
    %cst = arith.constant dense<0.000000e+00> : vector<1x1xf32>
    %1 = vector.multi_reduction <add>, %0, %cst [0] : vector<1x1x1xf32> to vector<1x1xf32>
    %c0_2 = arith.constant 0 : index
    %c0_3 = arith.constant 0 : index
    %2 = memref.load %arg2[%c0_2, %c0_3] : memref<1x1xf32, #tpu.memory_space<smem>>
    %3 = math.sqrt %1 : vector<1x1xf32>
    %4 = vector.broadcast %2 : f32 to vector<1x1xf32>
    %5 = arith.mulf %4, %3 : vector<1x1xf32>
    %c0_4 = arith.constant 0 : index
    %c0_5 = arith.constant 0 : index
    %6 = vector.load %arg3[%c0_4, %c0_5] : memref<2x4096xf32, #tpu.memory_space<vmem>>, vector<2x4096xf32>
    %c0_6 = arith.constant 0 : index
    %c0_7 = arith.constant 0 : index
    %7 = vector.load %arg4[%c0_6, %c0_7] : memref<1x4096xf32, #tpu.memory_space<vmem>>, vector<1x4096xf32>
    %8 = vector.broadcast %5 : vector<1x1xf32> to vector<1x4096xf32>
    %9 = arith.mulf %8, %7 : vector<1x4096xf32>
    %10 = vector.broadcast %9 : vector<1x4096xf32> to vector<2x4096xf32>
    %11 = arith.addf %6, %10 : vector<2x4096xf32>
    %c0_8 = arith.constant 0 : index
    %c0_9 = arith.constant 0 : index
    %12 = vector.load %arg5[%c0_8, %c0_9] : memref<2x4096xf32, #tpu.memory_space<vmem>>, vector<2x4096xf32>
    tpu.vector_store %arg5[%c0_8, %c0_9], %11 {strides = array<i32>} : memref<2x4096xf32, #tpu.memory_space<vmem>>, vector<2x4096xf32>,
    return
  }
  func.func @transform_0(%arg0: i32) -> (i32, i32, i32) {
    %c0_i32 = arith.constant 0 : i32
    %c0_i32_0 = arith.constant 0 : i32
    %c0_i32_1 = arith.constant 0 : i32
    %c0_i32_2 = arith.constant 0 : i32
    return %c0_i32, %c0_i32_0, %c0_i32_1 : i32, i32, i32
  }
  func.func @transform_1(%arg0: i32) -> (i32, i32) {
    %c0_i32 = arith.constant 0 : i32
    %c0_i32_0 = arith.constant 0 : i32
    %c0_i32_1 = arith.constant 0 : i32
    return %c0_i32, %c0_i32_0 : i32, i32
  }
  func.func @transform_2(%arg0: i32) -> (i32, i32) {
    %c0_i32 = arith.constant 0 : i32
    %c0_i32_0 = arith.constant 0 : i32
    return %c0_i32, %arg0 : i32, i32
  }
  func.func @transform_3(%arg0: i32) -> (i32, i32) {
    %c0_i32 = arith.constant 0 : i32
    %c0_i32_0 = arith.constant 0 : i32
    return %c0_i32, %arg0 : i32, i32
  }
  func.func @transform_4(%arg0: i32) -> (i32, i32) {
    %c0_i32 = arith.constant 0 : i32
    %c0_i32_0 = arith.constant 0 : i32
    return %c0_i32, %arg0 : i32, i32
  }
}

</mosaic_0001>

<llo_original>
// kernel: branch_1_fun.3
$region0: #{branch_1_fun.3}
  #allocation0 [shape = 'u32[]', space=smem, size = 0x4, offset = 0x4, fixed_abs, tag = 'smem constant byte address 0x4 - core index']
  #allocation1 [shape = 'u32[72,128]{1,0:T(1,128)}', space=vmem, size = 0x9000, scoped, tag = 'internal scratch']
  #allocation2 [shape = 'f32[1,1,1]{2,1,0:T(1,128)S(1)}', space=vmem, size = 0x200, scoped, tag = 'scoped memory for branch_1_fun.3']
  #allocation3 [shape = 'f32[1,1]{1,0:T(1,128)S(6)}', space=smem, size = 0x200, scoped, tag = 'scoped memory for branch_1_fun.3']
  %s0 = inlined_call_operand.<no memory space> [shape: f32[1,1,1], index: 0, kind: input, shape index: {}]
  %s1 = inlined_call_operand.<no memory space> [shape: f32[1,1], index: 1, kind: input, shape index: {}]
  %s2 = inlined_call_operand.vmem [shape: f32[2,4000], index: 2, kind: input, shape index: {}]
  %s3 = inlined_call_operand.vmem [shape: f32[1,4000], index: 3, kind: input, shape index: {}]
  %s4 = inlined_call_operand.hbm [shape: f32[2,4000], index: 4, kind: output, shape index: {}]
  %s5 = sld [smem:[#allocation0]]
  $region26: #{branch_1_fun.3} parent=0
    _
  %s7 = ssub.s32 1, %s5
  %s8 = scalar_select 0, %s7, %s5
  %v9 = vstv %s0
  %10 = vst [vmem:[#allocation2] sm:$0x1] %v9
  %11 = sst [smem:[#allocation3]] %s1
  $region1: #{branch_1_fun.3} parent=0
    #allocation4 [shape = 'u8[32768]{0}', space=vmem, size = 0x8000, scoped, tag = 'output window, operand 0, single buffered']
    #allocation5 [shape = 's32[1]{0}', space=sflag, size = 0x4, scoped, tag = 'scoped memory for branch_1_fun.3']
    %12 = vsyncpa [#allocation5], 0
    // Predicated region
    $region2: #{branch_1_fun.3} parent=1 // pred_check
      _
    $region3: #{branch_1_fun.3} parent=1 // pred_check_branch
      %14 = sbr.rel (0) target = $region5
    $region4: #{branch_1_fun.3} parent=1 // pred_region
      _
    $region5: #{branch_1_fun.3} parent=1 // pred_fallthru
      _
    // Predicated region
    $region6: #{branch_1_fun.3} parent=1 // pred_check
      _
    $region7: #{branch_1_fun.3} parent=1 // pred_check_branch
      %16 = sbr.rel (0) target = $region9
    $region8: #{branch_1_fun.3} parent=1 // pred_region
      _
    $region9: #{branch_1_fun.3} parent=1 // pred_fallthru
      _
    // Predicated region
    $region10: #{branch_1_fun.3} parent=1 // pred_check
      _
    $region11: #{branch_1_fun.3} parent=1 // pred_check_branch
      %18 = sbr.rel (0) target = $region13
    $region12: #{branch_1_fun.3} parent=1 // pred_region
      _
    $region13: #{branch_1_fun.3} parent=1 // pred_fallthru
      _
    // Predicated region
    $region14: #{branch_1_fun.3} parent=1 // pred_check
      _
    $region15: #{branch_1_fun.3} parent=1 // pred_check_branch
      %20 = sbr.rel (0) target = $region17
    $region16: #{branch_1_fun.3} parent=1 // pred_region
      _
    $region17: #{branch_1_fun.3} parent=1 // pred_fallthru
      _
    %v21 = vld [vmem:[#allocation2] sm:$0x1]
    %v22 = vadd.f32 %v21, 0.0
    %s23 = sld [smem:[#allocation3]]
    %v24 = vrsqrt.pop %v22
    %v25 = vmul.f32 %v24, %v22
    %v26 = vmul.f32 %v25, %v24
    %v27 = vmul.f32 0.5, %v26
    %v28 = vsub.f32 1.5, %v27
    %v29 = vmul.f32 %v24, %v28
    %v30 = vmul.f32 %v22, %v29
    %vm31 = vcmp.eq.f32.partialorder %v22, inf
    %v32 = vsel %vm31, %v22, %v30
    %vm33 = vcmp.eq.f32.partialorder %v22, 0.0
    %v34 = vand.u32 %v22, 2147483648
    %v35 = vsel %vm33, %v34, %v32
    %v36 = vstv %s23
    %v37 = vmul.f32 %v36, %v35
    %v38 = vld [vmem:[%s2] sm:$0xff]
    %v39 = vld [vmem:[%s2 + $0x8] sm:$0xff]
    %v40 = vld [vmem:[%s2 + $0x10] sm:$0xff]
    %v41 = vld [vmem:[%s2 + $0x18] sm:$0xff]
    %v42 = vld [vmem:[%s2 + $0x20] sm:$0xff]
    %v43 = vld [vmem:[%s2 + $0x28] sm:$0xff]
    %v44 = vld [vmem:[%s2 + $0x30] sm:$0xff]
    %v45 = vld [vmem:[%s2 + $0x38] sm:$0xff]
    %v46 = vld [vmem:[%s3] sm:$0xff]
    %v47 = vld [vmem:[%s3 + $0x8] sm:$0xff]
    %v48 = vld [vmem:[%s3 + $0x10] sm:$0xff]
    %v49 = vld [vmem:[%s3 + $0x18] sm:$0xff]
    %51 = vset.pattern.permute.xlu0 0
    %52 = vperm.xlu0 %51, %v37
    %v53 = vpop.permute.xlu0 %52
    %v55 = vperm.slane %v53, 0
    %v56 = vmul.f32 %v55, %v46
    %v57 = vmul.f32 %v55, %v47
    %v58 = vmul.f32 %v55, %v48
    %v59 = vmul.f32 %v55, %v49
    %v64 = vperm.slane %v56, 0
    %v65 = vperm.slane %v56, 1
    %v66 = vperm.slane %v56, 2
    %v67 = vperm.slane %v56, 3
    %v68 = vperm.slane %v56, 4
    %v69 = vperm.slane %v56, 5
    %v70 = vperm.slane %v56, 6
    %v71 = vperm.slane %v56, 7
    %v72 = vperm.slane %v57, 0
    %v73 = vperm.slane %v57, 1
    %v74 = vperm.slane %v57, 2
    %v75 = vperm.slane %v57, 3
    %v76 = vperm.slane %v57, 4
    %v77 = vperm.slane %v57, 5
    %v78 = vperm.slane %v57, 6
    %v79 = vperm.slane %v57, 7
    %v80 = vperm.slane %v58, 0
    %v81 = vperm.slane %v58, 1
    %v82 = vperm.slane %v58, 2
    %v83 = vperm.slane %v58, 3
    %v84 = vperm.slane %v58, 4
    %v85 = vperm.slane %v58, 5
    %v86 = vperm.slane %v58, 6
    %v87 = vperm.slane %v58, 7
    %v88 = vperm.slane %v59, 0
    %v89 = vperm.slane %v59, 1
    %v90 = vperm.slane %v59, 2
    %v91 = vperm.slane %v59, 3
    %v92 = vperm.slane %v59, 4
    %v93 = vperm.slane %v59, 5
    %v94 = vperm.slane %v59, 6
    %v95 = vperm.slane %v59, 7
    %v96 = vrot.slane %v65, 6
    %v97 = vrot.slane %v66, 4
    %v98 = vrot.slane %v67, 2
    %v99 = vrot.slane %v69, 6
    %v100 = vrot.slane %v70, 4
    %v101 = vrot.slane %v71, 2
    %v102 = vrot.slane %v73, 6
    %v103 = vrot.slane %v74, 4
    %v104 = vrot.slane %v75, 2
    %v105 = vrot.slane %v77, 6
    %v106 = vrot.slane %v78, 4
    %v107 = vrot.slane %v79, 2
    %v108 = vrot.slane %v81, 6
    %v109 = vrot.slane %v82, 4
    %v110 = vrot.slane %v83, 2
    %v111 = vrot.slane %v85, 6
    %v112 = vrot.slane %v86, 4
    %v113 = vrot.slane %v87, 2
    %v114 = vrot.slane %v89, 6
    %v115 = vrot.slane %v90, 4
    %v116 = vrot.slane %v91, 2
    %v117 = vrot.slane %v93, 6
    %v118 = vrot.slane %v94, 4
    %v119 = vrot.slane %v95, 2
    %vm120 = vcmask 1041408
    %v121 = vsel %vm120, %v64, %v96
    %vm122 = vcmask 1045508
    %v123 = vsel %vm122, %v97, %v98
    %vm124 = vcmask 1043456
    %v125 = vsel %vm124, %v121, %v123
    %v126 = vsel %vm120, %v68, %v99
    %v127 = vsel %vm122, %v100, %v101
    %v128 = vsel %vm124, %v126, %v127
    %v129 = vsel %vm120, %v72, %v102
    %v130 = vsel %vm122, %v103, %v104
    %v131 = vsel %vm124, %v129, %v130
    %v132 = vsel %vm120, %v76, %v105
    %v133 = vsel %vm122, %v106, %v107
    %v134 = vsel %vm124, %v132, %v133
    %v135 = vsel %vm120, %v80, %v108
    %v136 = vsel %vm122, %v109, %v110
    %v137 = vsel %vm124, %v135, %v136
    %v138 = vsel %vm120, %v84, %v111
    %v139 = vsel %vm122, %v112, %v113
    %v140 = vsel %vm124, %v138, %v139
    %v141 = vsel %vm120, %v88, %v114
    %v142 = vsel %vm122, %v115, %v116
    %v143 = vsel %vm124, %v141, %v142
    %v144 = vsel %vm120, %v92, %v117
    %v145 = vsel %vm122, %v118, %v119
    %v146 = vsel %vm124, %v144, %v145
    %v155 = vadd.f32 %v38, %v125
    %v156 = vadd.f32 %v39, %v128
    %v157 = vadd.f32 %v40, %v131
    %v158 = vadd.f32 %v41, %v134
    %v159 = vadd.f32 %v42, %v137
    %v160 = vadd.f32 %v43, %v140
    %v161 = vadd.f32 %v44, %v143
    %v162 = vadd.f32 %v45, %v146
    %163 = vst [vmem:[#allocation4] sm:$0xff] %v155
    %164 = vst [vmem:[#allocation4 + $0x8] sm:$0xff] %v156
    %165 = vst [vmem:[#allocation4 + $0x10] sm:$0xff] %v157
    %166 = vst [vmem:[#allocation4 + $0x18] sm:$0xff] %v158
    %167 = vst [vmem:[#allocation4 + $0x20] sm:$0xff] %v159
    %168 = vst [vmem:[#allocation4 + $0x28] sm:$0xff] %v160
    %169 = vst [vmem:[#allocation4 + $0x30] sm:$0xff] %v161
    %170 = vst [vmem:[#allocation4 + $0x38] sm:$0xff] %v162
    // Predicated region
    $region18: #{branch_1_fun.3} parent=1 // pred_check
      _
    $region19: #{branch_1_fun.3} parent=1 // pred_check_branch
      %172 = sbr.rel (0) target = $region21
    $region20: #{branch_1_fun.3} parent=1 // pred_region
      %174 = vsyncadd [#allocation5], 0
      %s176 = sshll.u32 [#allocation4], 4
      %s177 = int_to_ptr.vmem [resolvable:$true] %s176
      %s178 = sshll.u32 %s4, 4
      %s179 = int_to_ptr.hbm [resolvable:$true] %s178
      %181 = dma.vmem_to_hbm [thread:$0]  %s177, 1024, %s179, [#allocation5]
    $region21: #{branch_1_fun.3} parent=1 // pred_fallthru
      _
    // Predicated region
    $region22: #{branch_1_fun.3} parent=1 // pred_check
      _
    $region23: #{branch_1_fun.3} parent=1 // pred_check_branch
      %183 = sbr.rel (0) target = $region25
    $region24: #{branch_1_fun.3} parent=1 // pred_region
      %185 = dma.done [#allocation5], 1024
    $region25: #{branch_1_fun.3} parent=1 // pred_fallthru
      _
    %186 = vsyncpa [#allocation5], 1

// kernel: branch_1_fun.2
$region0: #{branch_1_fun.2}
  #allocation0 [shape = 'u32[]', space=smem, size = 0x4, offset = 0x4, fixed_abs, tag = 'smem constant byte address 0x4 - core index']
  #allocation1 [shape = 'u32[72,128]{1,0:T(1,128)}', space=vmem, size = 0x9000, scoped, tag = 'internal scratch']
  %s0 = inlined_call_operand.vmem [shape: f32[2,4000], index: 0, kind: input, shape index: {}]
  %s1 = inlined_call_operand.hbm [shape: f32[1,1,1], index: 1, kind: output, shape index: {}]
  %s2 = sld [smem:[#allocation0]]
  $region18: #{branch_1_fun.2} parent=0
    _
  %s4 = ssub.s32 1, %s2
  %s5 = scalar_select 0, %s4, %s2
  $region1: #{branch_1_fun.2} parent=0
    #allocation2 [shape = 'u8[512]{0}', space=vmem, size = 0x400, scoped, tag = 'output window, operand 0, single buffered']
    #allocation3 [shape = 's32[1]{0}', space=sflag, size = 0x4, scoped, tag = 'scoped memory for branch_1_fun.2']
    %6 = vsyncpa [#allocation3], 0
    // Predicated region
    $region2: #{branch_1_fun.2} parent=1 // pred_check
      _
    $region3: #{branch_1_fun.2} parent=1 // pred_check_branch
      %8 = sbr.rel (0) target = $region5
    $region4: #{branch_1_fun.2} parent=1 // pred_region
      %s9 = sadd.s32 0, 0
      %p10 = scmp.lt.s32.totalorder %s9, 0
      %s11 = scalar_select %p10, %s9, 0
      %s12 = smul.u32 32, %s11
      %p13 = scmp.lt.s32.totalorder %s12, 31
      %s14 = scalar_select %p13, %s12, 31
      %s15 = smul.addr %s14, 2
      %s16 = scalar_lea.vmem %s0, %s15
      %s17 = sadd.s32 0, 0
      %p18 = scmp.lt.s32.totalorder %s17, 0
      %s19 = scalar_select %p18, %s17, 0
      %s20 = smul.u32 32, %s19
    $region5: #{branch_1_fun.2} parent=1 // pred_fallthru
      _
    %s21 = sadd.s32 0, 0
    %p22 = scmp.lt.s32.totalorder %s21, 0
    %s23 = scalar_select %p22, %s21, 0
    %s24 = smul.u32 32, %s23
    %p25 = scmp.lt.s32.totalorder %s24, 31
    %s26 = scalar_select %p25, %s24, 31
    %s27 = smul.addr %s26, 2
    %s28 = scalar_lea.vmem %s0, %s27
    %s29 = sadd.s32 0, 0
    %p30 = scmp.lt.s32.totalorder %s29, 0
    %s31 = scalar_select %p30, %s29, 0
    %s32 = smul.u32 32, %s31
    %p33 = scmp.lt.s32.totalorder %s32, 31
    %s34 = scalar_select %p33, %s32, 31
    %s35 = smul.addr %s34, 2
    %s36 = scalar_lea.vmem %s0, %s35
    %s37 = sadd.s32 0, 0
    %p38 = scmp.lt.s32.totalorder %s37, 0
    %s39 = scalar_select %p38, %s37, 0
    %s40 = smul.u32 32, %s39
    %p41 = scmp.eq.s32.totalorder 0, 0
    // Predicated region
    $region6: #{branch_1_fun.2} parent=1 // pred_check
      %p42 = pneg %p41
    $region7: #{branch_1_fun.2} parent=1 // pred_check_branch
      %44 = sbr.rel (%p42) target = $region9
    $region8: #{branch_1_fun.2} parent=1 // pred_region
      %vm45 = vcmask 0
      %46 = vst.msk [vmem:[#allocation2] sm:$0x1] %vm45, 0.0
    $region9: #{branch_1_fun.2} parent=1 // pred_fallthru
      _
    %v47 = vld [vmem:[%s36] sm:$0xff]
    %v48 = vld [vmem:[%s36 + $0x8] sm:$0xff]
    %v49 = vld [vmem:[%s36 + $0x10] sm:$0xff]
    %v50 = vld [vmem:[%s36 + $0x18] sm:$0xff]
    %v51 = vld [vmem:[%s36 + $0x20] sm:$0xff]
    %v52 = vld [vmem:[%s36 + $0x28] sm:$0xff]
    %v53 = vld [vmem:[%s36 + $0x30] sm:$0xff]
    %v54 = vld [vmem:[%s36 + $0x38] sm:$0xff]
    %s55 = sadd.s32 0, 0
    %s56 = smul.u32 %s55, 4096
    %v57 = vlaneseq
    %v58 = vand.u32 %v57, 127
    %v59 = vadd.s32 %v58, 128
    %v60 = vadd.s32 %v58, 256
    %v61 = vadd.s32 %v58, 384
    %v62 = vadd.s32 %v58, 512
    %v63 = vadd.s32 %v58, 640
    %v64 = vadd.s32 %v58, 768
    %v65 = vadd.s32 %v58, 896
    %v66 = vadd.s32 %v58, 1024
    %v67 = vadd.s32 %v58, 1152
    %v68 = vadd.s32 %v58, 1280
    %v69 = vadd.s32 %v58, 1408
    %v70 = vadd.s32 %v58, 1536
    %v71 = vadd.s32 %v58, 1664
    %v72 = vadd.s32 %v58, 1792
    %v73 = vadd.s32 %v58, 1920
    %v74 = vadd.s32 %v58, 2048
    %v75 = vadd.s32 %v58, 2176
    %v76 = vadd.s32 %v58, 2304
    %v77 = vadd.s32 %v58, 2432
    %v78 = vadd.s32 %v58, 2560
    %v79 = vadd.s32 %v58, 2688
    %v80 = vadd.s32 %v58, 2816
    %v81 = vadd.s32 %v58, 2944
    %v82 = vadd.s32 %v58, 3072
    %v83 = vadd.s32 %v58, 3200
    %v84 = vadd.s32 %v58, 3328
    %v85 = vadd.s32 %v58, 3456
    %v86 = vadd.s32 %v58, 3584
    %v87 = vadd.s32 %v58, 3712
    %v88 = vadd.s32 %v58, 3840
    %v89 = vadd.s32 %v58, 3968
    %v90 = vstv %s56
    %v91 = vadd.s32 %v90, %v58
    %v92 = vadd.s32 %v90, %v59
    %v93 = vadd.s32 %v90, %v60
    %v94 = vadd.s32 %v90, %v61
    %v95 = vadd.s32 %v90, %v62
    %v96 = vadd.s32 %v90, %v63
    %v97 = vadd.s32 %v90, %v64
    %v98 = vadd.s32 %v90, %v65
    %v99 = vadd.s32 %v90, %v66
    %v100 = vadd.s32 %v90, %v67
    %v101 = vadd.s32 %v90, %v68
    %v102 = vadd.s32 %v90, %v69
    %v103 = vadd.s32 %v90, %v70
    %v104 = vadd.s32 %v90, %v71
    %v105 = vadd.s32 %v90, %v72
    %v106 = vadd.s32 %v90, %v73
    %v107 = vadd.s32 %v90, %v74
    %v108 = vadd.s32 %v90, %v75
    %v109 = vadd.s32 %v90, %v76
    %v110 = vadd.s32 %v90, %v77
    %v111 = vadd.s32 %v90, %v78
    %v112 = vadd.s32 %v90, %v79
    %v113 = vadd.s32 %v90, %v80
    %v114 = vadd.s32 %v90, %v81
    %v115 = vadd.s32 %v90, %v82
    %v116 = vadd.s32 %v90, %v83
    %v117 = vadd.s32 %v90, %v84
    %v118 = vadd.s32 %v90, %v85
    %v119 = vadd.s32 %v90, %v86
    %v120 = vadd.s32 %v90, %v87
    %v121 = vadd.s32 %v90, %v88
    %v122 = vadd.s32 %v90, %v89
    %vm123 = vcmp.lt.s32.totalorder %v91, 4000
    %vm124 = vcmp.lt.s32.totalorder %v92, 4000
    %vm125 = vcmp.lt.s32.totalorder %v93, 4000
    %vm126 = vcmp.lt.s32.totalorder %v94, 4000
    %vm127 = vcmp.lt.s32.totalorder %v95, 4000
    %vm128 = vcmp.lt.s32.totalorder %v96, 4000
    %vm129 = vcmp.lt.s32.totalorder %v97, 4000
    %vm130 = vcmp.lt.s32.totalorder %v98, 4000
    %vm131 = vcmp.lt.s32.totalorder %v99, 4000
    %vm132 = vcmp.lt.s32.totalorder %v100, 4000
    %vm133 = vcmp.lt.s32.totalorder %v101, 4000
    %vm134 = vcmp.lt.s32.totalorder %v102, 4000
    %vm135 = vcmp.lt.s32.totalorder %v103, 4000
    %vm136 = vcmp.lt.s32.totalorder %v104, 4000
    %vm137 = vcmp.lt.s32.totalorder %v105, 4000
    %vm138 = vcmp.lt.s32.totalorder %v106, 4000
    %vm139 = vcmp.lt.s32.totalorder %v107, 4000
    %vm140 = vcmp.lt.s32.totalorder %v108, 4000
    %vm141 = vcmp.lt.s32.totalorder %v109, 4000
    %vm142 = vcmp.lt.s32.totalorder %v110, 4000
    %vm143 = vcmp.lt.s32.totalorder %v111, 4000
    %vm144 = vcmp.lt.s32.totalorder %v112, 4000
    %vm145 = vcmp.lt.s32.totalorder %v113, 4000
    %vm146 = vcmp.lt.s32.totalorder %v114, 4000
    %vm147 = vcmp.lt.s32.totalorder %v115, 4000
    %vm148 = vcmp.lt.s32.totalorder %v116, 4000
    %vm149 = vcmp.lt.s32.totalorder %v117, 4000
    %vm150 = vcmp.lt.s32.totalorder %v118, 4000
    %vm151 = vcmp.lt.s32.totalorder %v119, 4000
    %vm152 = vcmp.lt.s32.totalorder %v120, 4000
    %vm153 = vcmp.lt.s32.totalorder %v121, 4000
    %vm154 = vcmp.lt.s32.totalorder %v122, 4000
    %163 = vst [vmem:[#allocation1] ss:$4 sm:$0xff] %v47
    %s164 = scalar_lea.vmem [#allocation1], 32
    %165 = vst [vmem:[%s164] ss:$4 sm:$0xff] %v48
    %v166 = vld.sshfl [vmem:[#allocation1] sm:$0xff pattern:$0x73625140]
    %v167 = vld.sshfl [vmem:[#allocation1 + $0x8] sm:$0xff pattern:$0x73625140]
    %v168 = vld.sshfl [vmem:[#allocation1 + $0x10] sm:$0xff pattern:$0x73625140]
    %v169 = vld.sshfl [vmem:[#allocation1 + $0x18] sm:$0xff pattern:$0x73625140]
    %v170 = vld.sshfl [vmem:[#allocation1 + $0x20] sm:$0xff pattern:$0x73625140]
    %v171 = vld.sshfl [vmem:[#allocation1 + $0x28] sm:$0xff pattern:$0x73625140]
    %v172 = vld.sshfl [vmem:[#allocation1 + $0x30] sm:$0xff pattern:$0x73625140]
    %v173 = vld.sshfl [vmem:[#allocation1 + $0x38] sm:$0xff pattern:$0x73625140]
    %174 = vst [vmem:[#allocation1] ss:$4 sm:$0xff] %v49
    %175 = vst [vmem:[%s164] ss:$4 sm:$0xff] %v50
    %v176 = vld.sshfl [vmem:[#allocation1] sm:$0xff pattern:$0x73625140]
    %v177 = vld.sshfl [vmem:[#allocation1 + $0x8] sm:$0xff pattern:$0x73625140]
    %v178 = vld.sshfl [vmem:[#allocation1 + $0x10] sm:$0xff pattern:$0x73625140]
    %v179 = vld.sshfl [vmem:[#allocation1 + $0x18] sm:$0xff pattern:$0x73625140]
    %v180 = vld.sshfl [vmem:[#allocation1 + $0x20] sm:$0xff pattern:$0x73625140]
    %v181 = vld.sshfl [vmem:[#allocation1 + $0x28] sm:$0xff pattern:$0x73625140]
    %v182 = vld.sshfl [vmem:[#allocation1 + $0x30] sm:$0xff pattern:$0x73625140]
    %v183 = vld.sshfl [vmem:[#allocation1 + $0x38] sm:$0xff pattern:$0x73625140]
    %184 = vst [vmem:[#allocation1] ss:$4 sm:$0xff] %v51
    %185 = vst [vmem:[%s164] ss:$4 sm:$0xff] %v52
    %v186 = vld.sshfl [vmem:[#allocation1] sm:$0xff pattern:$0x73625140]
    %v187 = vld.sshfl [vmem:[#allocation1 + $0x8] sm:$0xff pattern:$0x73625140]
    %v188 = vld.sshfl [vmem:[#allocation1 + $0x10] sm:$0xff pattern:$0x73625140]
    %v189 = vld.sshfl [vmem:[#allocation1 + $0x18] sm:$0xff pattern:$0x73625140]
    %v190 = vld.sshfl [vmem:[#allocation1 + $0x20] sm:$0xff pattern:$0x73625140]
    %v191 = vld.sshfl [vmem:[#allocation1 + $0x28] sm:$0xff pattern:$0x73625140]
    %v192 = vld.sshfl [vmem:[#allocation1 + $0x30] sm:$0xff pattern:$0x73625140]
    %v193 = vld.sshfl [vmem:[#allocation1 + $0x38] sm:$0xff pattern:$0x73625140]
    %194 = vst [vmem:[#allocation1] ss:$4 sm:$0xff] %v53
    %195 = vst [vmem:[%s164] ss:$4 sm:$0xff] %v54
    %v196 = vld.sshfl [vmem:[#allocation1] sm:$0xff pattern:$0x73625140]
    %v197 = vld.sshfl [vmem:[#allocation1 + $0x8] sm:$0xff pattern:$0x73625140]
    %v198 = vld.sshfl [vmem:[#allocation1 + $0x10] sm:$0xff pattern:$0x73625140]
    %v199 = vld.sshfl [vmem:[#allocation1 + $0x18] sm:$0xff pattern:$0x73625140]
    %v200 = vld.sshfl [vmem:[#allocation1 + $0x20] sm:$0xff pattern:$0x73625140]
    %v201 = vld.sshfl [vmem:[#allocation1 + $0x28] sm:$0xff pattern:$0x73625140]
    %v202 = vld.sshfl [vmem:[#allocation1 + $0x30] sm:$0xff pattern:$0x73625140]
    %v203 = vld.sshfl [vmem:[#allocation1 + $0x38] sm:$0xff pattern:$0x73625140]
    %v236 = vsel %vm123, %v166, 0.0
    %v237 = vsel %vm124, %v167, 0.0
    %v238 = vsel %vm125, %v168, 0.0
    %v239 = vsel %vm126, %v169, 0.0
    %v240 = vsel %vm127, %v170, 0.0
    %v241 = vsel %vm128, %v171, 0.0
    %v242 = vsel %vm129, %v172, 0.0
    %v243 = vsel %vm130, %v173, 0.0
    %v244 = vsel %vm131, %v176, 0.0
    %v245 = vsel %vm132, %v177, 0.0
    %v246 = vsel %vm133, %v178, 0.0
    %v247 = vsel %vm134, %v179, 0.0
    %v248 = vsel %vm135, %v180, 0.0
    %v249 = vsel %vm136, %v181, 0.0
    %v250 = vsel %vm137, %v182, 0.0
    %v251 = vsel %vm138, %v183, 0.0
    %v252 = vsel %vm139, %v186, 0.0
    %v253 = vsel %vm140, %v187, 0.0
    %v254 = vsel %vm141, %v188, 0.0
    %v255 = vsel %vm142, %v189, 0.0
    %v256 = vsel %vm143, %v190, 0.0
    %v257 = vsel %vm144, %v191, 0.0
    %v258 = vsel %vm145, %v192, 0.0
    %v259 = vsel %vm146, %v193, 0.0
    %v260 = vsel %vm147, %v196, 0.0
    %v261 = vsel %vm148, %v197, 0.0
    %v262 = vsel %vm149, %v198, 0.0
    %v263 = vsel %vm150, %v199, 0.0
    %v264 = vsel %vm151, %v200, 0.0
    %v265 = vsel %vm152, %v201, 0.0
    %v266 = vsel %vm153, %v202, 0.0
    %v267 = vsel %vm154, %v203, 0.0
    %v268 = vld [vmem:[#allocation2] sm:$0x1]
    %v269 = vmul.f32 %v236, %v236
    %v270 = vmul.f32 %v237, %v237
    %v271 = vmul.f32 %v238, %v238
    %v272 = vmul.f32 %v239, %v239
    %v273 = vmul.f32 %v240, %v240
    %v274 = vmul.f32 %v241, %v241
    %v275 = vmul.f32 %v242, %v242
    %v276 = vmul.f32 %v243, %v243
    %v277 = vmul.f32 %v244, %v244
    %v278 = vmul.f32 %v245, %v245
    %v279 = vmul.f32 %v246, %v246
    %v280 = vmul.f32 %v247, %v247
    %v281 = vmul.f32 %v248, %v248
    %v282 = vmul.f32 %v249, %v249
    %v283 = vmul.f32 %v250, %v250
    %v284 = vmul.f32 %v251, %v251
    %v285 = vmul.f32 %v252, %v252
    %v286 = vmul.f32 %v253, %v253
    %v287 = vmul.f32 %v254, %v254
    %v288 = vmul.f32 %v255, %v255
    %v289 = vmul.f32 %v256, %v256
    %v290 = vmul.f32 %v257, %v257
    %v291 = vmul.f32 %v258, %v258
    %v292 = vmul.f32 %v259, %v259
    %v293 = vmul.f32 %v260, %v260
    %v294 = vmul.f32 %v261, %v261
    %v295 = vmul.f32 %v262, %v262
    %v296 = vmul.f32 %v263, %v263
    %v297 = vmul.f32 %v264, %v264
    %v298 = vmul.f32 %v265, %v265
    %v299 = vmul.f32 %v266, %v266
    %v300 = vmul.f32 %v267, %v267
    %vm301 = vcmask 1041408
    %v302 = vsel %vm301, %v269, 0.0
    %v303 = vsel %vm301, %v270, 0.0
    %v304 = vadd.f32 %v302, %v303
    %v305 = vsel %vm301, %v271, 0.0
    %v306 = vadd.f32 %v304, %v305
    %v307 = vsel %vm301, %v272, 0.0
    %v308 = vadd.f32 %v306, %v307
    %v309 = vsel %vm301, %v273, 0.0
    %v310 = vadd.f32 %v308, %v309
    %v311 = vsel %vm301, %v274, 0.0
    %v312 = vadd.f32 %v310, %v311
    %v313 = vsel %vm301, %v275, 0.0
    %v314 = vadd.f32 %v312, %v313
    %v315 = vsel %vm301, %v276, 0.0
    %v316 = vadd.f32 %v314, %v315
    %v317 = vsel %vm301, %v277, 0.0
    %v318 = vadd.f32 %v316, %v317
    %v319 = vsel %vm301, %v278, 0.0
    %v320 = vadd.f32 %v318, %v319
    %v321 = vsel %vm301, %v279, 0.0
    %v322 = vadd.f32 %v320, %v321
    %v323 = vsel %vm301, %v280, 0.0
    %v324 = vadd.f32 %v322, %v323
    %v325 = vsel %vm301, %v281, 0.0
    %v326 = vadd.f32 %v324, %v325
    %v327 = vsel %vm301, %v282, 0.0
    %v328 = vadd.f32 %v326, %v327
    %v329 = vsel %vm301, %v283, 0.0
    %v330 = vadd.f32 %v328, %v329
    %v331 = vsel %vm301, %v284, 0.0
    %v332 = vadd.f32 %v330, %v331
    %v333 = vsel %vm301, %v285, 0.0
    %v334 = vadd.f32 %v332, %v333
    %v335 = vsel %vm301, %v286, 0.0
    %v336 = vadd.f32 %v334, %v335
    %v337 = vsel %vm301, %v287, 0.0
    %v338 = vadd.f32 %v336, %v337
    %v339 = vsel %vm301, %v288, 0.0
    %v340 = vadd.f32 %v338, %v339
    %v341 = vsel %vm301, %v289, 0.0
    %v342 = vadd.f32 %v340, %v341
    %v343 = vsel %vm301, %v290, 0.0
    %v344 = vadd.f32 %v342, %v343
    %v345 = vsel %vm301, %v291, 0.0
    %v346 = vadd.f32 %v344, %v345
    %v347 = vsel %vm301, %v292, 0.0
    %v348 = vadd.f32 %v346, %v347
    %v349 = vsel %vm301, %v293, 0.0
    %v350 = vadd.f32 %v348, %v349
    %v351 = vsel %vm301, %v294, 0.0
    %v352 = vadd.f32 %v350, %v351
    %v353 = vsel %vm301, %v295, 0.0
    %v354 = vadd.f32 %v352, %v353
    %v355 = vsel %vm301, %v296, 0.0
    %v356 = vadd.f32 %v354, %v355
    %v357 = vsel %vm301, %v297, 0.0
    %v358 = vadd.f32 %v356, %v357
    %v359 = vsel %vm301, %v298, 0.0
    %v360 = vadd.f32 %v358, %v359
    %v361 = vsel %vm301, %v299, 0.0
    %v362 = vadd.f32 %v360, %v361
    %v363 = vsel %vm301, %v300, 0.0
    %v364 = vadd.f32 %v362, %v363
    %365 = vadd.xlane.f32.xlu0 %v364
    %v366 = vpop.xlane.xlu0 %365
    %v367 = vrot.slane %v366, 4
    %v368 = vadd.f32 %v366, %v367
    %v369 = vrot.slane %v368, 2
    %v370 = vadd.f32 %v368, %v369
    %v371 = vrot.slane %v370, 1
    %v372 = vadd.f32 %v370, %v371
    %s373 = vtos %v372
    %v374 = vstv %s373
    %v375 = vadd.f32 %v268, %v374
    %vm376 = vcmask 0
    %377 = vst.msk [vmem:[#allocation2] sm:$0x1] %vm376, %v375
    // Predicated region
    $region10: #{branch_1_fun.2} parent=1 // pred_check
      _
    $region11: #{branch_1_fun.2} parent=1 // pred_check_branch
      %379 = sbr.rel (0) target = $region13
    $region12: #{branch_1_fun.2} parent=1 // pred_region
      %381 = vsyncadd [#allocation3], 0
      %s383 = sshll.u32 [#allocation2], 4
      %s384 = int_to_ptr.vmem [resolvable:$true] %s383
      %s385 = sshll.u32 %s1, 4
      %s386 = int_to_ptr.hbm [resolvable:$true] %s385
      %388 = dma.vmem_to_hbm [thread:$0]  %s384, 16, %s386, [#allocation3]
    $region13: #{branch_1_fun.2} parent=1 // pred_fallthru
      _
    // Predicated region
    $region14: #{branch_1_fun.2} parent=1 // pred_check
      _
    $region15: #{branch_1_fun.2} parent=1 // pred_check_branch
      %390 = sbr.rel (0) target = $region17
    $region16: #{branch_1_fun.2} parent=1 // pred_region
      %392 = dma.done [#allocation3], 16
    $region17: #{branch_1_fun.2} parent=1 // pred_fallthru
      _
    %393 = vsyncpa [#allocation3], 1

</llo_original>
